<compile_context>
chip_gen: v5e
topology: v5e:2x2
jax: 0.10.0
libtpu: 0.0.40
codegen_flags: <defaults>
</compile_context>

<pallas_src>
import functools

import jax
import jax.numpy as jnp
from jax import lax
from jax.experimental import pallas as pl
from jax.experimental.pallas import tpu as pltpu


def _round_up(x, m):
    return ((x + m - 1) // m) * m


def _cdiv(a, b):
    return -(-a // b)


def _vmem_capacity_bytes():
    # Per-TensorCore VMEM: 128 MiB on v5e/v6e, 64 MiB on v7x.
    try:
        cap = getattr(pltpu.get_tpu_info(), "vmem_capacity_bytes", None)
        if cap:
            return int(cap)
    except Exception:
        pass
    return 64 << 20  # conservative default (v7x per-TC)


# --------------------------------------------------------------------------- #
# Fused single-pass kernel (read x once, gate, scale, write once)
# --------------------------------------------------------------------------- #
def _se_fused_kernel(x_ref, w1_ref, b1_ref, w2_ref, b2_ref, o_ref, *,
                     inv_hw, use_mxu):
    # x_ref: (TB, C, HW) native dtype
    # w1_ref: (Cr, C), b1_ref: (1, Cr)   -- PyTorch Linear layout (out, in)
    # w2_ref: (C, Cr), b2_ref: (1, C)
    x = x_ref[...]                                            # (TB, C, HW)

    # --- squeeze: global average pool over spatial (lane) axis, f32 accum ---
    s = jnp.sum(x, axis=-1, dtype=jnp.float32) * inv_hw       # (TB, C) f32

    w1 = w1_ref[...].astype(jnp.float32)                      # (Cr, C)
    w2 = w2_ref[...].astype(jnp.float32)                      # (C, Cr)
    b1 = b1_ref[...].astype(jnp.float32)                      # (1, Cr)
    b2 = b2_ref[...].astype(jnp.float32)                      # (1, C)

    # --- excitation: Linear -> ReLU -> Linear -> Hardsigmoid ---
    if use_mxu:
        # Real SE sizes: contract s's C axis against the (out, in) weights
        # directly on the MXU (no transpose needed).
        h = lax.dot_general(s, w1, (((1,), (1,)), ((), ())),
                            preferred_element_type=jnp.float32) + b1   # (TB, Cr)
        h = jnp.maximum(h, 0.0)
        y = lax.dot_general(h, w2, (((1,), (1,)), ((), ())),
                            preferred_element_type=jnp.float32) + b2   # (TB, C)
    else:
        # Tiny C / Cr: broadcast-multiply + reduce on the VPU.
        h = jnp.sum(s[:, None, :] * w1[None, :, :], axis=-1) + b1      # (TB, Cr)
        h = jnp.maximum(h, 0.0)
        y = jnp.sum(h[:, None, :] * w2[None, :, :], axis=-1) + b2      # (TB, C)

    # Hardsigmoid: clip(x/6 + 0.5, 0, 1)
    y = jnp.clip(y * (1.0 / 6.0) + 0.5, 0.0, 1.0)             # (TB, C) f32

    # --- scale: broadcast channel gates over spatial, native dtype ---
    o_ref[...] = (x * y.astype(x.dtype)[:, :, None]).astype(o_ref.dtype)


def _se_fused(x_flat, w1, b1_2d, w2, b2_2d, *, B, C, Cr, HW, itemsize,
              bytes_per_row, weight_bytes, pipeline_budget, vmem_ceiling):
    # ---- batch-tile derivation ----
    tb = max(1, min(B, pipeline_budget // (4 * bytes_per_row)))
    if B >= 2:
        # Target >=4 grid steps (>=2 per v7x TensorCore; also gives v5e/v6e
        # steady-state read/write overlap), but never shrink a block below
        # ~1 MiB just to add steps (per-step fixed cost ~0.35 us).
        desired_steps = 4 if B >= 4 else 2
        tb_steps = max(1, B // desired_steps)
        floor_rows = max(1, _cdiv(1 << 20, bytes_per_row))
        tb = min(tb, max(tb_steps, floor_rows))
    tb = max(1, int(tb))

    num_blocks = _cdiv(B, tb)
    # Prefer an even step count so v7x's two TensorCores get balanced work.
    if num_blocks > 1 and num_blocks % 2 == 1:
        tb_even = _cdiv(B, num_blocks + 1)
        if tb_even >= 1 and _cdiv(B, tb_even) % 2 == 0:
            tb = tb_even
            num_blocks = _cdiv(B, tb)

    vmem_limit = min(vmem_ceiling,
                     max(32 << 20, 4 * tb * bytes_per_row + weight_bytes + (4 << 20)))

    use_mxu = (C >= 128 and Cr >= 8)
    kernel = functools.partial(_se_fused_kernel, inv_hw=1.0 / HW, use_mxu=use_mxu)

    cost = pl.CostEstimate(
        flops=2 * B * C * HW + 4 * B * C * Cr,
        transcendentals=0,
        bytes_accessed=2 * B * C * HW * itemsize + weight_bytes)

    return pl.pallas_call(
        kernel,
        out_shape=jax.ShapeDtypeStruct((B, C, HW), x_flat.dtype),
        grid_spec=pltpu.PrefetchScalarGridSpec(
            num_scalar_prefetch=0,
            grid=(num_blocks,),
            in_specs=[
                pl.BlockSpec((tb, C, HW), lambda b: (b, 0, 0)),   # x block
                pl.BlockSpec((Cr, C), lambda b: (0, 0)),          # W1
                pl.BlockSpec((1, Cr), lambda b: (0, 0)),          # b1
                pl.BlockSpec((C, Cr), lambda b: (0, 0)),          # W2
                pl.BlockSpec((1, C), lambda b: (0, 0)),           # b2
            ],
            out_specs=pl.BlockSpec((tb, C, HW), lambda b: (b, 0, 0)),
        ),
        compiler_params=pltpu.CompilerParams(
            dimension_semantics=("parallel",),
            vmem_limit_bytes=int(vmem_limit),
        ),
        cost_estimate=cost,
    )(x_flat, w1, b1_2d, w2, b2_2d)


# --------------------------------------------------------------------------- #
# Spatially-tiled two-pass fallback (for rows too large to fit the fused pipe)
# --------------------------------------------------------------------------- #
def _pool_kernel(x_ref, sum_ref, *, hw, ts):
    s_idx = pl.program_id(1)

    @pl.when(s_idx == 0)
    def _():
        sum_ref[...] = jnp.zeros_like(sum_ref)

    x = x_ref[...]                                            # (1, C, ts)
    if hw % ts != 0:
        # Mask the ragged tail spatial block so undefined lanes don't pollute
        # the pooled sum.
        lane = lax.broadcasted_iota(jnp.int32, x.shape, 2)
        x = jnp.where(s_idx * ts + lane < hw, x, jnp.zeros_like(x))
    sum_ref[...] += jnp.sum(x, axis=-1, keepdims=True, dtype=jnp.float32)


def _scale_kernel(x_ref, g_ref, o_ref):
    # x_ref: (1, C, ts), g_ref: (1, C, 1)
    o_ref[...] = (x_ref[...] * g_ref[...]).astype(o_ref.dtype)


def _se_two_pass(x_flat, w1, b1_2d, w2, b2_2d, *, B, C, Cr, HW, itemsize,
                 C_pad, pipeline_budget, vmem_ceiling):
    # Note: channels are not tiled here (C is a full-extent block dim); that is
    # sufficient for any realistic SE block (C up to a few thousand).
    dtype = x_flat.dtype

    # Spatial tile: multiple of 128 lanes sized to the pipeline budget.
    ts = max(128, (pipeline_budget // (4 * C_pad * itemsize)) // 128 * 128)
    if ts >= HW:
        ts = HW                        # full-extent last dim is always legal
    num_s = _cdiv(HW, ts)

    block_bytes = C_pad * _round_up(ts, 128) * itemsize
    vmem_limit = min(vmem_ceiling, max(32 << 20, 4 * block_bytes + (4 << 20)))

    # ---- pass 1: per-(b, c) pooled sums, accumulated over spatial tiles ----
    sums = pl.pallas_call(
        functools.partial(_pool_kernel, hw=HW, ts=ts),
        out_shape=jax.ShapeDtypeStruct((B, C, 1), jnp.float32),
        grid_spec=pltpu.PrefetchScalarGridSpec(
            num_scalar_prefetch=0,
            grid=(B, num_s),
            in_specs=[pl.BlockSpec((1, C, ts), lambda b, s: (b, 0, s))],
            out_specs=pl.BlockSpec((1, C, 1), lambda b, s: (b, 0, 0)),
        ),
        compiler_params=pltpu.CompilerParams(
            dimension_semantics=("parallel", "arbitrary"),
            vmem_limit_bytes=int(vmem_limit),
        ),
        cost_estimate=pl.CostEstimate(
            flops=B * C * HW, transcendentals=0,
            bytes_accessed=B * C * HW * itemsize + B * C * 4),
    )(x_flat)

    # ---- tiny excitation MLP on (B, C): negligible next to the x passes ----
    s = sums.reshape(B, C) * (1.0 / HW)
    h = jnp.maximum(s @ w1.astype(jnp.float32).T + b1_2d.astype(jnp.float32), 0.0)
    y = h @ w2.astype(jnp.float32).T + b2_2d.astype(jnp.float32)
    y = jnp.clip(y * (1.0 / 6.0) + 0.5, 0.0, 1.0)
    gates = y.astype(dtype).reshape(B, C, 1)

    # ---- pass 2: channel-wise scale ----
    return pl.pallas_call(
        _scale_kernel,
        out_shape=jax.ShapeDtypeStruct((B, C, HW), dtype),
        grid_spec=pltpu.PrefetchScalarGridSpec(
            num_scalar_prefetch=0,
            grid=(B, num_s),
            in_specs=[pl.BlockSpec((1, C, ts), lambda b, s: (b, 0, s)),
                      pl.BlockSpec((1, C, 1), lambda b, s: (b, 0, 0))],
            out_specs=pl.BlockSpec((1, C, ts), lambda b, s: (b, 0, s)),
        ),
        compiler_params=pltpu.CompilerParams(
            dimension_semantics=("parallel", "parallel"),
            vmem_limit_bytes=int(vmem_limit),
        ),
        cost_estimate=pl.CostEstimate(
            flops=B * C * HW, transcendentals=0,
            bytes_accessed=2 * B * C * HW * itemsize + B * C * itemsize),
    )(x_flat, gates)


# --------------------------------------------------------------------------- #
# Public wrapper
# --------------------------------------------------------------------------- #
def se_block(x, w1, b1, w2, b2, *, force_fallback=False):
    """SE block forward. x: (B, C, H, W). Weights in PyTorch Linear (out, in) layout."""
    B, C, H, W = x.shape
    Cr = w1.shape[0]
    HW = H * W
    itemsize = jnp.dtype(x.dtype).itemsize

    # No HBM-side padding/slicing: contiguous reshapes only (zero-copy).
    x_flat = x.reshape(B, C, HW)
    b1_2d = b1.reshape(1, Cr)
    b2_2d = b2.reshape(1, C)

    # Generation-aware VMEM budget (64 MiB/TC on v7x, 128 MiB on v5e/v6e).
    vmem_cap = _vmem_capacity_bytes()
    vmem_ceiling = max(32 << 20, vmem_cap - (8 << 20))
    pipeline_budget = min(48 << 20, vmem_ceiling - (4 << 20))

    # VMEM tiles pad the last two dims to (8, 128) internally; use padded sizes
    # for the budget arithmetic only (no data padding in HBM).
    C_pad = _round_up(C, 8)
    HW_pad = _round_up(HW, 128)
    bytes_per_row = C_pad * HW_pad * itemsize
    weight_bytes = 2 * (2 * C * Cr + C + Cr) * 4

    fused_fits = (4 * bytes_per_row + weight_bytes + (4 << 20)) <= vmem_ceiling

    if fused_fits and not force_fallback:
        out = _se_fused(x_flat, w1, b1_2d, w2, b2_2d, B=B, C=C, Cr=Cr, HW=HW,
                        itemsize=itemsize, bytes_per_row=bytes_per_row,
                        weight_bytes=weight_bytes,
                        pipeline_budget=pipeline_budget,
                        vmem_ceiling=vmem_ceiling)
    else:
        out = _se_two_pass(x_flat, w1, b1_2d, w2, b2_2d, B=B, C=C, Cr=Cr, HW=HW,
                           itemsize=itemsize, C_pad=C_pad,
                           pipeline_budget=pipeline_budget,
                           vmem_ceiling=vmem_ceiling)
    return out.reshape(B, C, H, W)


def _reference(x, w1, b1, w2, b2):
    # Pure-JAX reference matching PyTorch SE_block.forward.
    s = jnp.mean(x, axis=(2, 3))                      # (B, C)
    h = jnp.maximum(s @ w1.T + b1, 0.0)               # (B, Cr)
    y = h @ w2.T + b2                                 # (B, C)
    y = jnp.clip(y / 6.0 + 0.5, 0.0, 1.0)             # Hardsigmoid
    return y[:, :, None, None] * x


if __name__ == "__main__":
    # Module config: inchannel=8, ratio=4 -> hidden = 2
    B, C, H, W = 2, 8, 16, 16
    ratio = 4
    Cr = C // ratio

    key = jax.random.PRNGKey(0)
    kx, k1, k2, k3, k4 = jax.random.split(key, 5)

    x = jax.random.normal(kx, (B, C, H, W), dtype=jnp.float32)
    # Deterministic synthetic parameters (PyTorch Linear layout: (out, in)).
    w1 = jax.random.normal(k1, (Cr, C), dtype=jnp.float32) * 0.5
    b1 = jax.random.normal(k2, (Cr,), dtype=jnp.float32) * 0.1
    w2 = jax.random.normal(k3, (C, Cr), dtype=jnp.float32) * 0.5
    b2 = jax.random.normal(k4, (C,), dtype=jnp.float32) * 0.1

    ref = _reference(x, w1, b1, w2, b2)

    # Fused single-pass path.
    out = jax.block_until_ready(se_block(x, w1, b1, w2, b2))
    assert out.shape == (B, C, H, W)
    assert jnp.allclose(out, ref, atol=1e-5, rtol=1e-5)

    # Also exercise the spatially-tiled two-pass fallback path (used when one
    # batch row's (C, HW) slab would not fit the fused VMEM pipeline).
    out_fb = jax.block_until_ready(se_block(x, w1, b1, w2, b2, force_fallback=True))
    assert jnp.allclose(out_fb, ref, atol=1e-5, rtol=1e-5)

    print("KERNEL_OK")
</pallas_src>

<mosaic_0001>
module attributes {stable_mosaic.version = 11 : i64} {
  func.func @_se_fused_kernel(%arg0: i32, %arg1: memref<2x8x256xf32, #tpu.memory_space<vmem>>, %arg2: memref<2x8xf32, #tpu.memory_space<vmem>>, %arg3: memref<1x2xf32, #tpu.memory_space<vmem>>, %arg4: memref<8x2xf32, #tpu.memory_space<vmem>>, %arg5: memref<1x8xf32, #tpu.memory_space<vmem>>, %arg6: memref<2x8x256xf32, #tpu.memory_space<vmem>>) attributes {dimension_semantics = [#tpu.dimension_semantics<parallel>], iteration_bounds = array<i64: 1>, scalar_prefetch = 0 : i64, scratch_operands = 0 : i64, tpu.core_type = #tpu.core_type<tc>, window_params = [{transform_indices = @transform_0, window_bounds = array<i64: 2, 8, 256>}, {pipeline_mode = #tpu.pipeline_mode<synchronous>, transform_indices = @transform_1, window_bounds = array<i64: 2, 8>}, {pipeline_mode = #tpu.pipeline_mode<synchronous>, transform_indices = @transform_2, window_bounds = array<i64: 1, 2>}, {pipeline_mode = #tpu.pipeline_mode<synchronous>, transform_indices = @transform_3, window_bounds = array<i64: 8, 2>}, {pipeline_mode = #tpu.pipeline_mode<synchronous>, transform_indices = @transform_4, window_bounds = array<i64: 1, 8>}, {transform_indices = @transform_5, window_bounds = array<i64: 2, 8, 256>}]} {
    %c0 = arith.constant 0 : index
    %c0_0 = arith.constant 0 : index
    %c0_1 = arith.constant 0 : index
    %0 = vector.load %arg1[%c0, %c0_0, %c0_1] : memref<2x8x256xf32, #tpu.memory_space<vmem>>, vector<2x8x256xf32>
    %cst = arith.constant dense<0.000000e+00> : vector<2x8xf32>
    %1 = vector.multi_reduction <add>, %0, %cst [2] : vector<2x8x256xf32> to vector<2x8xf32>
    %cst_2 = arith.constant 3.906250e-03 : f32
    %2 = vector.broadcast %cst_2 : f32 to vector<2x8xf32>
    %3 = arith.mulf %1, %2 : vector<2x8xf32>
    %c0_3 = arith.constant 0 : index
    %c0_4 = arith.constant 0 : index
    %4 = vector.load %arg2[%c0_3, %c0_4] : memref<2x8xf32, #tpu.memory_space<vmem>>, vector<2x8xf32>
    %c0_5 = arith.constant 0 : index
    %c0_6 = arith.constant 0 : index
    %5 = vector.load %arg4[%c0_5, %c0_6] : memref<8x2xf32, #tpu.memory_space<vmem>>, vector<8x2xf32>
    %c0_7 = arith.constant 0 : index
    %c0_8 = arith.constant 0 : index
    %6 = vector.load %arg3[%c0_7, %c0_8] : memref<1x2xf32, #tpu.memory_space<vmem>>, vector<1x2xf32>
    %c0_9 = arith.constant 0 : index
    %c0_10 = arith.constant 0 : index
    %7 = vector.load %arg5[%c0_9, %c0_10] : memref<1x8xf32, #tpu.memory_space<vmem>>, vector<1x8xf32>
    %8 = vector.shape_cast %3 : vector<2x8xf32> to vector<2x1x8xf32>
    %9 = vector.shape_cast %4 : vector<2x8xf32> to vector<1x2x8xf32>
    %10 = vector.broadcast %8 : vector<2x1x8xf32> to vector<2x2x8xf32>
    %11 = vector.broadcast %9 : vector<1x2x8xf32> to vector<2x2x8xf32>
    %12 = arith.mulf %10, %11 : vector<2x2x8xf32>
    %cst_11 = arith.constant dense<0.000000e+00> : vector<2x2xf32>
    %13 = vector.multi_reduction <add>, %12, %cst_11 [2] : vector<2x2x8xf32> to vector<2x2xf32>
    %14 = vector.broadcast %6 : vector<1x2xf32> to vector<2x2xf32>
    %15 = arith.addf %13, %14 : vector<2x2xf32>
    %cst_12 = arith.constant 0.000000e+00 : f32
    %16 = vector.broadcast %cst_12 : f32 to vector<2x2xf32>
    %17 = arith.maximumf %15, %16 : vector<2x2xf32>
    %18 = vector.shape_cast %17 : vector<2x2xf32> to vector<2x1x2xf32>
    %19 = vector.shape_cast %5 : vector<8x2xf32> to vector<1x8x2xf32>
    %20 = vector.broadcast %18 : vector<2x1x2xf32> to vector<2x8x2xf32>
    %21 = vector.broadcast %19 : vector<1x8x2xf32> to vector<2x8x2xf32>
    %22 = arith.mulf %20, %21 : vector<2x8x2xf32>
    %cst_13 = arith.constant dense<0.000000e+00> : vector<2x8xf32>
    %23 = vector.multi_reduction <add>, %22, %cst_13 [2] : vector<2x8x2xf32> to vector<2x8xf32>
    %24 = vector.broadcast %7 : vector<1x8xf32> to vector<2x8xf32>
    %25 = arith.addf %23, %24 : vector<2x8xf32>
    %cst_14 = arith.constant 0.166666672 : f32
    %26 = vector.broadcast %cst_14 : f32 to vector<2x8xf32>
    %27 = arith.mulf %25, %26 : vector<2x8xf32>
    %cst_15 = arith.constant 5.000000e-01 : f32
    %28 = vector.broadcast %cst_15 : f32 to vector<2x8xf32>
    %29 = arith.addf %27, %28 : vector<2x8xf32>
    %cst_16 = arith.constant 0.000000e+00 : f32
    %cst_17 = arith.constant 1.000000e+00 : f32
    %30 = vector.broadcast %cst_16 : f32 to vector<2x8xf32>
    %31 = arith.maximumf %30, %29 : vector<2x8xf32>
    %32 = vector.broadcast %cst_17 : f32 to vector<2x8xf32>
    %33 = arith.minimumf %32, %31 : vector<2x8xf32>
    %34 = vector.shape_cast %33 : vector<2x8xf32> to vector<2x8x1xf32>
    %35 = vector.broadcast %34 : vector<2x8x1xf32> to vector<2x8x256xf32>
    %36 = arith.mulf %0, %35 : vector<2x8x256xf32>
    %c0_18 = arith.constant 0 : index
    %c0_19 = arith.constant 0 : index
    %c0_20 = arith.constant 0 : index
    %37 = vector.load %arg6[%c0_18, %c0_19, %c0_20] : memref<2x8x256xf32, #tpu.memory_space<vmem>>, vector<2x8x256xf32>
    tpu.vector_store %arg6[%c0_18, %c0_19, %c0_20], %36 {strides = array<i32>} : memref<2x8x256xf32, #tpu.memory_space<vmem>>, vector<2x8x256xf32>,
    return
  }
  func.func @transform_0(%arg0: i32) -> (i32, i32, i32) {
    %c0_i32 = arith.constant 0 : i32
    %c0_i32_0 = arith.constant 0 : i32
    %c0_i32_1 = arith.constant 0 : i32
    return %arg0, %c0_i32, %c0_i32_0 : i32, i32, i32
  }
  func.func @transform_1(%arg0: i32) -> (i32, i32) {
    %c0_i32 = arith.constant 0 : i32
    %c0_i32_0 = arith.constant 0 : i32
    %c0_i32_1 = arith.constant 0 : i32
    return %c0_i32, %c0_i32_0 : i32, i32
  }
  func.func @transform_2(%arg0: i32) -> (i32, i32) {
    %c0_i32 = arith.constant 0 : i32
    %c0_i32_0 = arith.constant 0 : i32
    %c0_i32_1 = arith.constant 0 : i32
    return %c0_i32, %c0_i32_0 : i32, i32
  }
  func.func @transform_3(%arg0: i32) -> (i32, i32) {
    %c0_i32 = arith.constant 0 : i32
    %c0_i32_0 = arith.constant 0 : i32
    %c0_i32_1 = arith.constant 0 : i32
    return %c0_i32, %c0_i32_0 : i32, i32
  }
  func.func @transform_4(%arg0: i32) -> (i32, i32) {
    %c0_i32 = arith.constant 0 : i32
    %c0_i32_0 = arith.constant 0 : i32
    %c0_i32_1 = arith.constant 0 : i32
    return %c0_i32, %c0_i32_0 : i32, i32
  }
  func.func @transform_5(%arg0: i32) -> (i32, i32, i32) {
    %c0_i32 = arith.constant 0 : i32
    %c0_i32_0 = arith.constant 0 : i32
    %c0_i32_1 = arith.constant 0 : i32
    return %arg0, %c0_i32, %c0_i32_0 : i32, i32, i32
  }
}

</mosaic_0001>

<llo_original>
// kernel: tpu_custom_call.1
$region0: #{tpu_custom_call.1}
  #allocation0 [shape = 'u32[]', space=smem, size = 0x4, offset = 0x4, fixed_abs, tag = 'smem constant byte address 0x4 - core index']
  #allocation1 [shape = 'u32[72,128]{1,0:T(1,128)}', space=vmem, size = 0x9000, scoped, tag = 'internal scratch']
  %s0 = inlined_call_operand.hbm [shape: f32[2,8,256], index: 0, kind: input, shape index: {}]
  %s1 = inlined_call_operand.vmem [shape: f32[2,8], index: 1, kind: input, shape index: {}]
  %s2 = inlined_call_operand.vmem [shape: f32[1,2], index: 2, kind: input, shape index: {}]
  %s3 = inlined_call_operand.vmem [shape: f32[8,2], index: 3, kind: input, shape index: {}]
  %s4 = inlined_call_operand.vmem [shape: f32[1,8], index: 4, kind: input, shape index: {}]
  %s5 = inlined_call_operand.hbm [shape: f32[2,8,256], index: 5, kind: output, shape index: {}]
  %s6 = sld [smem:[#allocation0]]
  $region34: #{tpu_custom_call.1} parent=0
    _
  %s8 = ssub.s32 1, %s6
  %s9 = scalar_select 0, %s8, %s6
  $region1: #{tpu_custom_call.1} parent=0
    #allocation2 [shape = 'u8[16384]{0}', space=vmem, size = 0x4000, scoped, tag = 'input window, operand 0, single buffered']
    #allocation3 [shape = 's32[1]{0}', space=sflag, size = 0x4, scoped, tag = 'scoped memory for tpu_custom_call.1']
    #allocation4 [shape = 's32[1]{0}', space=sflag, size = 0x4, scoped, tag = 'scoped memory for tpu_custom_call.1']
    #allocation5 [shape = 'u8[16384]{0}', space=vmem, size = 0x4000, scoped, tag = 'output window, operand 0, single buffered']
    %10 = vsyncpa [#allocation3], 0
    %11 = vsyncpa [#allocation4], 0
    // Predicated region
    $region2: #{tpu_custom_call.1} parent=1 // pred_check
      _
    $region3: #{tpu_custom_call.1} parent=1 // pred_check_branch
      %13 = sbr.rel (0) target = $region5
    $region4: #{tpu_custom_call.1} parent=1 // pred_region
      %15 = vsyncadd [#allocation3], 0
      %s16 = sshll.u32 %s0, 4
      %s17 = int_to_ptr.hbm [resolvable:$true] %s16
      %s18 = sshll.u32 [#allocation2], 4
      %s19 = int_to_ptr.vmem [resolvable:$true] %s18
      %24 = dma.hbm_to_vmem [thread:$0]  %s17, 512, %s19, [#allocation3], 256, 256, 16
    $region5: #{tpu_custom_call.1} parent=1 // pred_fallthru
      _
    // Predicated region
    $region6: #{tpu_custom_call.1} parent=1 // pred_check
      _
    $region7: #{tpu_custom_call.1} parent=1 // pred_check_branch
      %26 = sbr.rel (0) target = $region9
    $region8: #{tpu_custom_call.1} parent=1 // pred_region
      _
    $region9: #{tpu_custom_call.1} parent=1 // pred_fallthru
      _
    // Predicated region
    $region10: #{tpu_custom_call.1} parent=1 // pred_check
      _
    $region11: #{tpu_custom_call.1} parent=1 // pred_check_branch
      %28 = sbr.rel (0) target = $region13
    $region12: #{tpu_custom_call.1} parent=1 // pred_region
      _
    $region13: #{tpu_custom_call.1} parent=1 // pred_fallthru
      _
    // Predicated region
    $region14: #{tpu_custom_call.1} parent=1 // pred_check
      _
    $region15: #{tpu_custom_call.1} parent=1 // pred_check_branch
      %30 = sbr.rel (0) target = $region17
    $region16: #{tpu_custom_call.1} parent=1 // pred_region
      _
    $region17: #{tpu_custom_call.1} parent=1 // pred_fallthru
      _
    // Predicated region
    $region18: #{tpu_custom_call.1} parent=1 // pred_check
      _
    $region19: #{tpu_custom_call.1} parent=1 // pred_check_branch
      %32 = sbr.rel (0) target = $region21
    $region20: #{tpu_custom_call.1} parent=1 // pred_region
      _
    $region21: #{tpu_custom_call.1} parent=1 // pred_fallthru
      _
    // Predicated region
    $region22: #{tpu_custom_call.1} parent=1 // pred_check
      _
    $region23: #{tpu_custom_call.1} parent=1 // pred_check_branch
      %34 = sbr.rel (0) target = $region25
    $region24: #{tpu_custom_call.1} parent=1 // pred_region
      %36 = dma.done [#allocation3], 512
    $region25: #{tpu_custom_call.1} parent=1 // pred_fallthru
      _
    %v37 = vld [vmem:[#allocation2] sm:$0xff]
    %v38 = vld [vmem:[#allocation2 + $0x8] sm:$0xff]
    %v39 = vld [vmem:[#allocation2 + $0x10] sm:$0xff]
    %v40 = vld [vmem:[#allocation2 + $0x18] sm:$0xff]
    %v41 = vadd.f32 %v37, %v38
    %42 = vadd.xlane.f32.xlu0 %v41
    %v43 = vpop.xlane.xlu0 %42
    %v44 = vadd.f32 %v39, %v40
    %45 = vadd.xlane.f32.xlu0 %v44
    %v46 = vpop.xlane.xlu0 %45
    %v47 = vmul.f32 %v43, 0.00390625
    %v48 = vmul.f32 %v46, 0.00390625
    %v49 = vld [vmem:[%s1] sm:$0x3]
    %v50 = vld [vmem:[%s3] sm:$0xff]
    %v51 = vld [vmem:[%s2] sm:$0x1]
    %v52 = vld [vmem:[%s4] sm:$0x1]
    %v54 = vperm.slane %v49, 0
    %v55 = vlaneseq
    %v56 = vshrl.u32 %v55, 7
    %58 = vset.pattern.permute.xlu0 %v56
    %59 = vperm.xlu0 %58, %v54
    %v60 = vpop.permute.xlu0 %59
    %v61 = vperm.slane %v49, 1
    %v62 = vlaneseq
    %v63 = vshrl.u32 %v62, 7
    %65 = vset.pattern.permute.xlu0 %v63
    %66 = vperm.xlu0 %65, %v61
    %v67 = vpop.permute.xlu0 %66
    %v70 = vmul.f32 %v47, %v60
    %v71 = vmul.f32 %v47, %v67
    %v72 = vmul.f32 %v48, %v60
    %v73 = vmul.f32 %v48, %v67
    %78 = vset.pattern.permute.xlu0 0
    %79 = vperm.xlu0 %78, %v70
    %v80 = vpop.permute.xlu0 %79
    %81 = vset.pattern.permute.xlu0 0
    %82 = vperm.xlu0 %81, %v71
    %v83 = vpop.permute.xlu0 %82
    %84 = vset.pattern.permute.xlu0 0
    %85 = vperm.xlu0 %84, %v72
    %v86 = vpop.permute.xlu0 %85
    %87 = vset.pattern.permute.xlu0 0
    %88 = vperm.xlu0 %87, %v73
    %v89 = vpop.permute.xlu0 %88
    %v90 = vlaneseq
    %v91 = vand.u32 %v90, 127
    %v92 = vperm.slane %v80, %v91
    %v93 = vperm.slane %v83, %v91
    %v94 = vperm.slane %v86, %v91
    %v95 = vperm.slane %v89, %v91
    %vm96 = vcmask 1041409
    %v97 = vsel %vm96, %v93, %v92
    %v98 = vsel %vm96, %v95, %v94
    %vm101 = vcmask 58368
    %v102 = vsel %vm101, %v97, 0.0
    %103 = vadd.xlane.f32.xlu0 %v102
    %v104 = vpop.xlane.xlu0 %103
    %v105 = vsel %vm101, %v98, 0.0
    %106 = vadd.xlane.f32.xlu0 %v105
    %v107 = vpop.xlane.xlu0 %106
    %v109 = vperm.slane %v51, 0
    %v110 = vlaneseq
    %v111 = vshrl.u32 %v110, 7
    %113 = vset.pattern.permute.xlu0 %v111
    %114 = vperm.xlu0 %113, %v109
    %v115 = vpop.permute.xlu0 %114
    %v117 = vadd.f32 %v104, %v115
    %v118 = vadd.f32 %v107, %v115
    %v119 = vmax.f32 %v117, 0.0
    %v120 = vmax.f32 %v118, 0.0
    %v122 = vperm.slane %v50, 0
    %v123 = vlaneseq
    %v124 = vshrl.u32 %v123, 7
    %126 = vset.pattern.permute.xlu0 %v124
    %127 = vperm.xlu0 %126, %v122
    %v128 = vpop.permute.xlu0 %127
    %v129 = vperm.slane %v50, 1
    %v130 = vlaneseq
    %v131 = vshrl.u32 %v130, 7
    %133 = vset.pattern.permute.xlu0 %v131
    %134 = vperm.xlu0 %133, %v129
    %v135 = vpop.permute.xlu0 %134
    %v136 = vperm.slane %v50, 2
    %v137 = vlaneseq
    %v138 = vshrl.u32 %v137, 7
    %140 = vset.pattern.permute.xlu0 %v138
    %141 = vperm.xlu0 %140, %v136
    %v142 = vpop.permute.xlu0 %141
    %v143 = vperm.slane %v50, 3
    %v144 = vlaneseq
    %v145 = vshrl.u32 %v144, 7
    %147 = vset.pattern.permute.xlu0 %v145
    %148 = vperm.xlu0 %147, %v143
    %v149 = vpop.permute.xlu0 %148
    %v150 = vperm.slane %v50, 4
    %v151 = vlaneseq
    %v152 = vshrl.u32 %v151, 7
    %154 = vset.pattern.permute.xlu0 %v152
    %155 = vperm.xlu0 %154, %v150
    %v156 = vpop.permute.xlu0 %155
    %v157 = vperm.slane %v50, 5
    %v158 = vlaneseq
    %v159 = vshrl.u32 %v158, 7
    %161 = vset.pattern.permute.xlu0 %v159
    %162 = vperm.xlu0 %161, %v157
    %v163 = vpop.permute.xlu0 %162
    %v164 = vperm.slane %v50, 6
    %v165 = vlaneseq
    %v166 = vshrl.u32 %v165, 7
    %168 = vset.pattern.permute.xlu0 %v166
    %169 = vperm.xlu0 %168, %v164
    %v170 = vpop.permute.xlu0 %169
    %v171 = vperm.slane %v50, 7
    %v172 = vlaneseq
    %v173 = vshrl.u32 %v172, 7
    %175 = vset.pattern.permute.xlu0 %v173
    %176 = vperm.xlu0 %175, %v171
    %v177 = vpop.permute.xlu0 %176
    %v186 = vmul.f32 %v119, %v128
    %v187 = vmul.f32 %v119, %v135
    %v188 = vmul.f32 %v119, %v142
    %v189 = vmul.f32 %v119, %v149
    %v190 = vmul.f32 %v119, %v156
    %v191 = vmul.f32 %v119, %v163
    %v192 = vmul.f32 %v119, %v170
    %v193 = vmul.f32 %v119, %v177
    %v194 = vmul.f32 %v120, %v128
    %v195 = vmul.f32 %v120, %v135
    %v196 = vmul.f32 %v120, %v142
    %v197 = vmul.f32 %v120, %v149
    %v198 = vmul.f32 %v120, %v156
    %v199 = vmul.f32 %v120, %v163
    %v200 = vmul.f32 %v120, %v170
    %v201 = vmul.f32 %v120, %v177
    %218 = vset.pattern.permute.xlu0 0
    %219 = vperm.xlu0 %218, %v186
    %v220 = vpop.permute.xlu0 %219
    %221 = vset.pattern.permute.xlu0 0
    %222 = vperm.xlu0 %221, %v187
    %v223 = vpop.permute.xlu0 %222
    %224 = vset.pattern.permute.xlu0 0
    %225 = vperm.xlu0 %224, %v188
    %v226 = vpop.permute.xlu0 %225
    %227 = vset.pattern.permute.xlu0 0
    %228 = vperm.xlu0 %227, %v189
    %v229 = vpop.permute.xlu0 %228
    %230 = vset.pattern.permute.xlu0 0
    %231 = vperm.xlu0 %230, %v190
    %v232 = vpop.permute.xlu0 %231
    %233 = vset.pattern.permute.xlu0 0
    %234 = vperm.xlu0 %233, %v191
    %v235 = vpop.permute.xlu0 %234
    %236 = vset.pattern.permute.xlu0 0
    %237 = vperm.xlu0 %236, %v192
    %v238 = vpop.permute.xlu0 %237
    %239 = vset.pattern.permute.xlu0 0
    %240 = vperm.xlu0 %239, %v193
    %v241 = vpop.permute.xlu0 %240
    %242 = vset.pattern.permute.xlu0 0
    %243 = vperm.xlu0 %242, %v194
    %v244 = vpop.permute.xlu0 %243
    %245 = vset.pattern.permute.xlu0 0
    %246 = vperm.xlu0 %245, %v195
    %v247 = vpop.permute.xlu0 %246
    %248 = vset.pattern.permute.xlu0 0
    %249 = vperm.xlu0 %248, %v196
    %v250 = vpop.permute.xlu0 %249
    %251 = vset.pattern.permute.xlu0 0
    %252 = vperm.xlu0 %251, %v197
    %v253 = vpop.permute.xlu0 %252
    %254 = vset.pattern.permute.xlu0 0
    %255 = vperm.xlu0 %254, %v198
    %v256 = vpop.permute.xlu0 %255
    %257 = vset.pattern.permute.xlu0 0
    %258 = vperm.xlu0 %257, %v199
    %v259 = vpop.permute.xlu0 %258
    %260 = vset.pattern.permute.xlu0 0
    %261 = vperm.xlu0 %260, %v200
    %v262 = vpop.permute.xlu0 %261
    %263 = vset.pattern.permute.xlu0 0
    %264 = vperm.xlu0 %263, %v201
    %v265 = vpop.permute.xlu0 %264
    %v266 = vperm.slane %v220, %v91
    %v267 = vperm.slane %v223, %v91
    %v268 = vperm.slane %v226, %v91
    %v269 = vperm.slane %v229, %v91
    %v270 = vperm.slane %v232, %v91
    %v271 = vperm.slane %v235, %v91
    %v272 = vperm.slane %v238, %v91
    %v273 = vperm.slane %v241, %v91
    %v274 = vperm.slane %v244, %v91
    %v275 = vperm.slane %v247, %v91
    %v276 = vperm.slane %v250, %v91
    %v277 = vperm.slane %v253, %v91
    %v278 = vperm.slane %v256, %v91
    %v279 = vperm.slane %v259, %v91
    %v280 = vperm.slane %v262, %v91
    %v281 = vperm.slane %v265, %v91
    %v282 = vsel %vm96, %v267, %v266
    %vm283 = vcmask 1042434
    %v284 = vsel %vm283, %v268, %v282
    %vm285 = vcmask 1043459
    %v286 = vsel %vm285, %v269, %v284
    %vm287 = vcmask 1044484
    %v288 = vsel %vm287, %v270, %v286
    %vm289 = vcmask 1045509
    %v290 = vsel %vm289, %v271, %v288
    %vm291 = vcmask 1046534
    %v292 = vsel %vm291, %v272, %v290
    %vm293 = vcmask 1047559
    %v294 = vsel %vm293, %v273, %v292
    %v295 = vsel %vm96, %v275, %v274
    %v296 = vsel %vm283, %v276, %v295
    %v297 = vsel %vm285, %v277, %v296
    %v298 = vsel %vm287, %v278, %v297
    %v299 = vsel %vm289, %v279, %v298
    %v300 = vsel %vm291, %v280, %v299
    %v301 = vsel %vm293, %v281, %v300
    %vm304 = vcmask 15360
    %v305 = vsel %vm304, %v294, 0.0
    %306 = vadd.xlane.f32.xlu0 %v305
    %v307 = vpop.xlane.xlu0 %306
    %v308 = vsel %vm304, %v301, 0.0
    %309 = vadd.xlane.f32.xlu0 %v308
    %v310 = vpop.xlane.xlu0 %309
    %v312 = vperm.slane %v52, 0
    %v313 = vlaneseq
    %v314 = vshrl.u32 %v313, 7
    %316 = vset.pattern.permute.xlu0 %v314
    %317 = vperm.xlu0 %316, %v312
    %v318 = vpop.permute.xlu0 %317
    %v320 = vadd.f32 %v307, %v318
    %v321 = vadd.f32 %v310, %v318
    %v322 = vmul.f32 %v320, 0.16666667
    %v323 = vmul.f32 %v321, 0.16666667
    %v324 = vadd.f32 %v322, 0.5
    %v325 = vadd.f32 %v323, 0.5
    %v326 = vmax.f32 %v324, 0.0
    %v327 = vmax.f32 %v325, 0.0
    %v328 = vmin.f32 %v326, 1.0
    %v329 = vmin.f32 %v327, 1.0
    %331 = vset.pattern.permute.xlu0 0
    %332 = vperm.xlu0 %331, %v328
    %v333 = vpop.permute.xlu0 %332
    %336 = vset.pattern.permute.xlu0 0
    %337 = vperm.xlu0 %336, %v329
    %v338 = vpop.permute.xlu0 %337
    %v340 = vmul.f32 %v37, %v333
    %v341 = vmul.f32 %v38, %v333
    %v342 = vmul.f32 %v39, %v338
    %v343 = vmul.f32 %v40, %v338
    %344 = vst [vmem:[#allocation5] sm:$0xff] %v340
    %345 = vst [vmem:[#allocation5 + $0x8] sm:$0xff] %v341
    %346 = vst [vmem:[#allocation5 + $0x10] sm:$0xff] %v342
    %347 = vst [vmem:[#allocation5 + $0x18] sm:$0xff] %v343
    // Predicated region
    $region26: #{tpu_custom_call.1} parent=1 // pred_check
      _
    $region27: #{tpu_custom_call.1} parent=1 // pred_check_branch
      %349 = sbr.rel (0) target = $region29
    $region28: #{tpu_custom_call.1} parent=1 // pred_region
      %351 = vsyncadd [#allocation4], 0
      %s352 = sshll.u32 [#allocation5], 4
      %s353 = int_to_ptr.vmem [resolvable:$true] %s352
      %s354 = sshll.u32 %s5, 4
      %s355 = int_to_ptr.hbm [resolvable:$true] %s354
      %360 = dma.vmem_to_hbm [thread:$0]  %s353, 512, %s355, [#allocation4], 256, 256, 16
    $region29: #{tpu_custom_call.1} parent=1 // pred_fallthru
      _
    // Predicated region
    $region30: #{tpu_custom_call.1} parent=1 // pred_check
      _
    $region31: #{tpu_custom_call.1} parent=1 // pred_check_branch
      %362 = sbr.rel (0) target = $region33
    $region32: #{tpu_custom_call.1} parent=1 // pred_region
      %364 = dma.done [#allocation4], 512
    $region33: #{tpu_custom_call.1} parent=1 // pred_fallthru
      _
    %365 = vsyncpa [#allocation3], 1
    %366 = vsyncpa [#allocation4], 1

</llo_original>
